<compile_context>
chip_gen: v6e
topology: v6e:2x2x1
jax: 0.10.0
libtpu: 0.0.40
codegen_flags: <defaults>
</compile_context>

<pallas_src>
import functools

import numpy as np
import jax
import jax.numpy as jnp
from jax.experimental import pallas as pl
from jax.experimental.pallas import tpu as pltpu

# ----------------------------- config (synthetic, small) ----------------------
VOCAB = 256
HIDDEN = 128          # args.hidden_size
HEAD_DIM = 16         # args.head_dim
ROPE_THETA = 10000.0  # args.rope_theta
TRAIN_PI = 1.0        # args.train_pi (position-interpolation scale)
BATCH = 2
SEQ = 8
MASK_VALUE = -2.3819763e38   # fine in f32/bf16; would overflow in fp16/fp8.

LANES = 128


def _pick_tile(dim, target, align):
    """Largest tile <= target that is a multiple of `align` and divides `dim`,
    or the full dim when it is small / not alignable (full-dim blocks are legal)."""
    if dim <= target or dim % align != 0:
        return dim
    t = (target // align) * align
    while dim % t != 0:
        t -= align
    return t


def _freq_constants(head_dim, theta):
    """Hoisted host-side RoPE constants, packed into one (8, 128) f32 slab:
       row 0: per-lane inv_freq (lane<half -> k=lane ; half<=lane<2*half -> k=lane-half)
       row 1: 1.0 where the lane holds sin, else 0.0
       row 2: 1.0 where the lane is valid (lane < head_dim), else 0.0"""
    half = head_dim // 2
    assert head_dim % 2 == 0 and head_dim <= LANES
    lanes = np.arange(LANES)
    k = np.where(lanes < half, lanes, lanes - half).astype(np.float64)
    inv_freq = 1.0 / (theta ** (2.0 * k / float(head_dim)))
    inv_freq = np.where(lanes < 2 * half, inv_freq, 0.0)
    c = np.zeros((8, LANES), np.float32)
    c[0, :] = inv_freq
    c[1, :] = ((lanes >= half) & (lanes < 2 * half)).astype(np.float32)
    c[2, :] = (lanes < 2 * half).astype(np.float32)
    return c


# ------------------------------ fused forward kernel --------------------------
def _fused_kernel(ids_ref, w_ref, const_ref, hid_ref, mask_ref, freq_ref, *,
                  scale, train_pi, mask_value):
    """One grid step = one row stripe of the sequence.

    ids_ref  : (B*S,) int32 in SMEM  (scalar-prefetched flat token ids)
    w_ref    : (V, 1, H)  VMEM-resident embedding table
    const_ref: (8, 128)   hoisted RoPE constants (inv_freq / sin-select / valid)
    hid_ref  : (B*tr, H)  scaled embeddings for this stripe's tokens
    mask_ref : (tr, S)    causal-mask row stripe (lane-dense full rows)
    freq_ref : (tr, 128)  cos|sin slab: lanes [0,half)=cos, [half,2*half)=sin, rest 0
    """
    i = pl.program_id(0)
    tr, seq = mask_ref.shape

    # ---- causal mask stripe: 0 on/below the diagonal, mask_value above -------
    row = i * tr + jax.lax.broadcasted_iota(jnp.int32, (tr, seq), 0)
    col = jax.lax.broadcasted_iota(jnp.int32, (tr, seq), 1)
    mask_ref[...] = jnp.where(col > row, jnp.float32(mask_value),
                              jnp.float32(0.0)).astype(mask_ref.dtype)

    # ---- RoPE phases: one lane-dense 128-wide store (no concat, no masked vst)
    inv_freq = const_ref[0:1, :]          # (1, 128)
    sin_sel = const_ref[1:2, :]           # (1, 128)
    valid = const_ref[2:3, :]             # (1, 128)
    pos = (i * tr + jax.lax.broadcasted_iota(jnp.int32, (tr, LANES), 0)
           ).astype(jnp.float32) / train_pi
    ang = pos * inv_freq                  # (tr, 128)
    # cos lanes get coeff (valid - sin_sel) = 1, sin lanes get sin_sel = 1, pad -> 0
    freq_ref[...] = sin_sel * jnp.sin(ang) + (valid - sin_sel) * jnp.cos(ang)

    # ---- exact embedding gather: per-token dynamic row load from the table ----
    tn_tok = hid_ref.shape[0]
    base = i * tn_tok
    for t in range(tn_tok):               # static unroll (tn_tok is small here)
        tok = ids_ref[base + t]           # SMEM scalar read
        hid_ref[pl.ds(t, 1), :] = (w_ref[tok] * scale).astype(hid_ref.dtype)
    # TODO(synk): for realistic vocab sizes the table will not fit in VMEM
    # (especially v7x's 64 MiB); switch to a DMA row-gather driven by the SMEM
    # ids (or vocab-tile with an accumulator) and single-buffer the table.


# ------------------------------- wrapper ---------------------------------------
@functools.partial(
    jax.jit, static_argnames=("hidden_size", "head_dim", "rope_theta", "train_pi"))
def embedding_pipeline_forward(input_ids, labels, weight, *, hidden_size, head_dim,
                               rope_theta, train_pi):
    B, S = input_ids.shape
    V, H = weight.shape
    n = B * S
    scale = float(hidden_size) ** 0.5

    tr = _pick_tile(S, 256, 8)            # mask/freqs row-stripe height
    grid_steps = S // tr                  # >=2 stripes at production S -> both TCs
    assert n % grid_steps == 0
    tn_tok = n // grid_steps              # tokens gathered per grid step (= B * tr)

    ids_flat = input_ids.reshape(-1).astype(jnp.int32)
    w3 = weight.reshape(V, 1, H)          # leading-dim-indexable resident table
    const = jnp.asarray(_freq_constants(head_dim, rope_theta))

    out_dtype = weight.dtype              # torch: mask & hidden in hidden_states.dtype
    hidden, mask, freq_pad = pl.pallas_call(
        functools.partial(_fused_kernel, scale=scale, train_pi=float(train_pi),
                          mask_value=MASK_VALUE),
        out_shape=(jax.ShapeDtypeStruct((n, H), out_dtype),
                   jax.ShapeDtypeStruct((S, S), out_dtype),
                   jax.ShapeDtypeStruct((S, LANES), jnp.float32)),
        grid_spec=pltpu.PrefetchScalarGridSpec(
            num_scalar_prefetch=1,
            grid=(grid_steps,),
            in_specs=[
                pl.BlockSpec((V, 1, H), lambda i, ids: (0, 0, 0)),   # resident table
                pl.BlockSpec((8, LANES), lambda i, ids: (0, 0)),     # RoPE constants
            ],
            out_specs=[
                pl.BlockSpec((tn_tok, H), lambda i, ids: (i, 0)),    # embeddings
                pl.BlockSpec((tr, S), lambda i, ids: (i, 0)),        # full-row stripe
                pl.BlockSpec((tr, LANES), lambda i, ids: (i, 0)),    # cos|sin slab
            ]),
        compiler_params=pltpu.CompilerParams(
            dimension_semantics=("parallel",),
            vmem_limit_bytes=32 * 1024 * 1024),
    )(ids_flat, w3, const)

    hidden_states = hidden.reshape(B, S, H)
    attention_mask = mask.reshape(1, 1, S, S)
    half = head_dim // 2
    # torch.polar(ones, freqs) -> cos + i*sin (complex64)
    freqs_cis = jax.lax.complex(freq_pad[:, :half], freq_pad[:, half:2 * half])
    return hidden_states, freqs_cis, attention_mask, labels


class EmbeddingPipelineLayer:
    """Pallas port of the PyTorch EmbeddingPipelineLayer (forward only)."""

    def __init__(self, weight, hidden_size, head_dim, rope_theta, train_pi):
        self.weight = weight
        self.hidden_size = int(hidden_size)
        self.head_dim = int(head_dim)
        self.rope_theta = float(rope_theta)
        self.train_pi = float(train_pi)

    def __call__(self, inputs):
        input_ids, labels = inputs
        # TODO(synk): requires_grad_ bookkeeping on freqs_cis / attention_mask has
        # no Pallas equivalent (forward-only port). Exact train_pi semantics of the
        # original precompute_freqs_cis are not given; standard RoPE with position
        # interpolation (t / train_pi) is implemented.
        return embedding_pipeline_forward(
            input_ids, labels, self.weight,
            hidden_size=self.hidden_size, head_dim=self.head_dim,
            rope_theta=self.rope_theta, train_pi=self.train_pi)


# ----------------------------------- main --------------------------------------
if __name__ == "__main__":
    key = jax.random.PRNGKey(0)
    k_w, k_ids, k_lbl = jax.random.split(key, 3)

    weight = jax.random.normal(k_w, (VOCAB, HIDDEN), dtype=jnp.float32) * 0.02
    input_ids = jax.random.randint(k_ids, (BATCH, SEQ), 0, VOCAB, dtype=jnp.int32)
    labels = jax.random.randint(k_lbl, (BATCH, SEQ), 0, VOCAB, dtype=jnp.int32)

    layer = EmbeddingPipelineLayer(weight, HIDDEN, HEAD_DIM, ROPE_THETA, TRAIN_PI)
    hidden_states, freqs_cis, attention_mask, labels_out = layer((input_ids, labels))
    jax.block_until_ready((hidden_states, freqs_cis, attention_mask, labels_out))

    # --- correctness checks against a plain-JAX / numpy reference ---
    ref_hidden = jnp.take(weight, input_ids, axis=0) * (float(HIDDEN) ** 0.5)
    assert jnp.allclose(hidden_states, ref_hidden, rtol=1e-6, atol=0.0), \
        "embedding mismatch"

    ref_mask = jnp.where(
        jnp.arange(SEQ)[None, :] > jnp.arange(SEQ)[:, None],
        jnp.float32(MASK_VALUE), jnp.float32(0.0)).reshape(1, 1, SEQ, SEQ)
    assert jnp.array_equal(attention_mask, ref_mask), "mask mismatch"

    inv_freq = 1.0 / (ROPE_THETA ** (np.arange(0, HEAD_DIM, 2, dtype=np.float64)
                                     / HEAD_DIM))
    ref_ang = np.outer(np.arange(SEQ, dtype=np.float64) / TRAIN_PI, inv_freq)
    ref_cis = jnp.asarray(np.cos(ref_ang) + 1j * np.sin(ref_ang), dtype=jnp.complex64)
    assert jnp.allclose(freqs_cis, ref_cis, atol=1e-5), "freqs_cis mismatch"

    assert hidden_states.shape == (BATCH, SEQ, HIDDEN)
    assert hidden_states.dtype == weight.dtype
    assert attention_mask.shape == (1, 1, SEQ, SEQ)
    assert freqs_cis.shape == (SEQ, HEAD_DIM // 2) and freqs_cis.dtype == jnp.complex64
    assert labels_out.shape == (BATCH, SEQ)

    print("KERNEL_OK")
</pallas_src>

<mosaic_0001>
module attributes {stable_mosaic.version = 11 : i64} {
  func.func @_fused_kernel(%arg0: i32, %arg1: memref<16xi32, #tpu.memory_space<smem>>, %arg2: memref<256x1x128xf32, #tpu.memory_space<vmem>>, %arg3: memref<8x128xf32, #tpu.memory_space<vmem>>, %arg4: memref<16x128xf32, #tpu.memory_space<vmem>>, %arg5: memref<8x8xf32, #tpu.memory_space<vmem>>, %arg6: memref<8x128xf32, #tpu.memory_space<vmem>>) attributes {dimension_semantics = [#tpu.dimension_semantics<parallel>], iteration_bounds = array<i64: 1>, scalar_prefetch = 1 : i64, scratch_operands = 0 : i64, tpu.core_type = #tpu.core_type<tc>, window_params = [{pipeline_mode = #tpu.pipeline_mode<synchronous>, transform_indices = @transform_0, window_bounds = array<i64: 256, 1, 128>}, {pipeline_mode = #tpu.pipeline_mode<synchronous>, transform_indices = @transform_1, window_bounds = array<i64: 8, 128>}, {transform_indices = @transform_2, window_bounds = array<i64: 16, 128>}, {transform_indices = @transform_3, window_bounds = array<i64: 8, 8>}, {transform_indices = @transform_4, window_bounds = array<i64: 8, 128>}]} {
    %c8_i32 = arith.constant 8 : i32
    %0 = arith.muli %arg0, %c8_i32 : i32
    %1 = tpu.iota {dimensions = array<i32: 0>} : vector<8x8xi32>
    %2 = vector.broadcast %0 : i32 to vector<8x8xi32>
    %3 = arith.addi %2, %1 : vector<8x8xi32>
    %4 = tpu.iota {dimensions = array<i32: 1>} : vector<8x8xi32>
    %5 = arith.cmpi sgt, %4, %3 : vector<8x8xi32>
    %cst = arith.constant -2.38197633E+38 : f32
    %cst_0 = arith.constant 0.000000e+00 : f32
    %6 = vector.broadcast %cst : f32 to vector<8x8xf32>
    %7 = vector.broadcast %cst_0 : f32 to vector<8x8xf32>
    %8 = arith.select %5, %6, %7 : vector<8x8xi1>, vector<8x8xf32>
    %c0 = arith.constant 0 : index
    %c0_1 = arith.constant 0 : index
    %9 = vector.load %arg5[%c0, %c0_1] : memref<8x8xf32, #tpu.memory_space<vmem>>, vector<8x8xf32>
    tpu.vector_store %arg5[%c0, %c0_1], %8 {strides = array<i32>} : memref<8x8xf32, #tpu.memory_space<vmem>>, vector<8x8xf32>,
    %c0_2 = arith.constant 0 : index
    %c0_3 = arith.constant 0 : index
    %10 = vector.load %arg3[%c0_2, %c0_3] : memref<8x128xf32, #tpu.memory_space<vmem>>, vector<1x128xf32>
    %c1 = arith.constant 1 : index
    %c0_4 = arith.constant 0 : index
    %11 = vector.load %arg3[%c1, %c0_4] : memref<8x128xf32, #tpu.memory_space<vmem>>, vector<1x128xf32>
    %c2 = arith.constant 2 : index
    %c0_5 = arith.constant 0 : index
    %12 = vector.load %arg3[%c2, %c0_5] : memref<8x128xf32, #tpu.memory_space<vmem>>, vector<1x128xf32>
    %c8_i32_6 = arith.constant 8 : i32
    %13 = arith.muli %arg0, %c8_i32_6 : i32
    %14 = tpu.iota {dimensions = array<i32: 0>} : vector<8x128xi32>
    %15 = vector.broadcast %13 : i32 to vector<8x128xi32>
    %16 = arith.addi %15, %14 : vector<8x128xi32>
    %17 = arith.sitofp %16 : vector<8x128xi32> to vector<8x128xf32>
    %cst_7 = arith.constant 1.000000e+00 : f32
    %18 = vector.broadcast %cst_7 : f32 to vector<8x128xf32>
    %19 = arith.divf %17, %18 : vector<8x128xf32>
    %20 = vector.broadcast %10 : vector<1x128xf32> to vector<8x128xf32>
    %21 = arith.mulf %19, %20 : vector<8x128xf32>
    %22 = math.sin %21 : vector<8x128xf32>
    %23 = vector.broadcast %11 : vector<1x128xf32> to vector<8x128xf32>
    %24 = arith.mulf %23, %22 : vector<8x128xf32>
    %25 = arith.subf %12, %11 : vector<1x128xf32>
    %26 = math.cos %21 : vector<8x128xf32>
    %27 = vector.broadcast %25 : vector<1x128xf32> to vector<8x128xf32>
    %28 = arith.mulf %27, %26 : vector<8x128xf32>
    %29 = arith.addf %24, %28 : vector<8x128xf32>
    %c0_8 = arith.constant 0 : index
    %c0_9 = arith.constant 0 : index
    %30 = vector.load %arg6[%c0_8, %c0_9] : memref<8x128xf32, #tpu.memory_space<vmem>>, vector<8x128xf32>
    tpu.vector_store %arg6[%c0_8, %c0_9], %29 {strides = array<i32>} : memref<8x128xf32, #tpu.memory_space<vmem>>, vector<8x128xf32>,
    %c16_i32 = arith.constant 16 : i32
    %31 = arith.muli %arg0, %c16_i32 : i32
    %c0_i32 = arith.constant 0 : i32
    %32 = arith.addi %31, %c0_i32 : i32
    %33 = arith.index_cast %32 : i32 to index
    %34 = memref.load %arg1[%33] : memref<16xi32, #tpu.memory_space<smem>>
    %35 = arith.index_cast %34 : i32 to index
    %c0_10 = arith.constant 0 : index
    %c0_11 = arith.constant 0 : index
    %36 = vector.load %arg2[%35, %c0_10, %c0_11] : memref<256x1x128xf32, #tpu.memory_space<vmem>>, vector<1x1x128xf32>
    %37 = vector.shape_cast %36 : vector<1x1x128xf32> to vector<1x128xf32>
    %cst_12 = arith.constant 11.3137083 : f32
    %38 = vector.broadcast %cst_12 : f32 to vector<1x128xf32>
    %39 = arith.mulf %37, %38 : vector<1x128xf32>
    %c0_13 = arith.constant 0 : index
    %c0_14 = arith.constant 0 : index
    %40 = vector.load %arg4[%c0_13, %c0_14] : memref<16x128xf32, #tpu.memory_space<vmem>>, vector<1x128xf32>
    tpu.vector_store %arg4[%c0_13, %c0_14], %39 {strides = array<i32>} : memref<16x128xf32, #tpu.memory_space<vmem>>, vector<1x128xf32>,
    %c1_i32 = arith.constant 1 : i32
    %41 = arith.addi %31, %c1_i32 : i32
    %42 = arith.index_cast %41 : i32 to index
    %43 = memref.load %arg1[%42] : memref<16xi32, #tpu.memory_space<smem>>
    %44 = arith.index_cast %43 : i32 to index
    %c0_15 = arith.constant 0 : index
    %c0_16 = arith.constant 0 : index
    %45 = vector.load %arg2[%44, %c0_15, %c0_16] : memref<256x1x128xf32, #tpu.memory_space<vmem>>, vector<1x1x128xf32>
    %46 = vector.shape_cast %45 : vector<1x1x128xf32> to vector<1x128xf32>
    %cst_17 = arith.constant 11.3137083 : f32
    %47 = vector.broadcast %cst_17 : f32 to vector<1x128xf32>
    %48 = arith.mulf %46, %47 : vector<1x128xf32>
    %c1_18 = arith.constant 1 : index
    %c0_19 = arith.constant 0 : index
    %49 = vector.load %arg4[%c1_18, %c0_19] : memref<16x128xf32, #tpu.memory_space<vmem>>, vector<1x128xf32>
    tpu.vector_store %arg4[%c1_18, %c0_19], %48 {strides = array<i32>} : memref<16x128xf32, #tpu.memory_space<vmem>>, vector<1x128xf32>,
    %c2_i32 = arith.constant 2 : i32
    %50 = arith.addi %31, %c2_i32 : i32
    %51 = arith.index_cast %50 : i32 to index
    %52 = memref.load %arg1[%51] : memref<16xi32, #tpu.memory_space<smem>>
    %53 = arith.index_cast %52 : i32 to index
    %c0_20 = arith.constant 0 : index
    %c0_21 = arith.constant 0 : index
    %54 = vector.load %arg2[%53, %c0_20, %c0_21] : memref<256x1x128xf32, #tpu.memory_space<vmem>>, vector<1x1x128xf32>
    %55 = vector.shape_cast %54 : vector<1x1x128xf32> to vector<1x128xf32>
    %cst_22 = arith.constant 11.3137083 : f32
    %56 = vector.broadcast %cst_22 : f32 to vector<1x128xf32>
    %57 = arith.mulf %55, %56 : vector<1x128xf32>
    %c2_23 = arith.constant 2 : index
    %c0_24 = arith.constant 0 : index
    %58 = vector.load %arg4[%c2_23, %c0_24] : memref<16x128xf32, #tpu.memory_space<vmem>>, vector<1x128xf32>
    tpu.vector_store %arg4[%c2_23, %c0_24], %57 {strides = array<i32>} : memref<16x128xf32, #tpu.memory_space<vmem>>, vector<1x128xf32>,
    %c3_i32 = arith.constant 3 : i32
    %59 = arith.addi %31, %c3_i32 : i32
    %60 = arith.index_cast %59 : i32 to index
    %61 = memref.load %arg1[%60] : memref<16xi32, #tpu.memory_space<smem>>
    %62 = arith.index_cast %61 : i32 to index
    %c0_25 = arith.constant 0 : index
    %c0_26 = arith.constant 0 : index
    %63 = vector.load %arg2[%62, %c0_25, %c0_26] : memref<256x1x128xf32, #tpu.memory_space<vmem>>, vector<1x1x128xf32>
    %64 = vector.shape_cast %63 : vector<1x1x128xf32> to vector<1x128xf32>
    %cst_27 = arith.constant 11.3137083 : f32
    %65 = vector.broadcast %cst_27 : f32 to vector<1x128xf32>
    %66 = arith.mulf %64, %65 : vector<1x128xf32>
    %c3 = arith.constant 3 : index
    %c0_28 = arith.constant 0 : index
    %67 = vector.load %arg4[%c3, %c0_28] : memref<16x128xf32, #tpu.memory_space<vmem>>, vector<1x128xf32>
    tpu.vector_store %arg4[%c3, %c0_28], %66 {strides = array<i32>} : memref<16x128xf32, #tpu.memory_space<vmem>>, vector<1x128xf32>,
    %c4_i32 = arith.constant 4 : i32
    %68 = arith.addi %31, %c4_i32 : i32
    %69 = arith.index_cast %68 : i32 to index
    %70 = memref.load %arg1[%69] : memref<16xi32, #tpu.memory_space<smem>>
    %71 = arith.index_cast %70 : i32 to index
    %c0_29 = arith.constant 0 : index
    %c0_30 = arith.constant 0 : index
    %72 = vector.load %arg2[%71, %c0_29, %c0_30] : memref<256x1x128xf32, #tpu.memory_space<vmem>>, vector<1x1x128xf32>
    %73 = vector.shape_cast %72 : vector<1x1x128xf32> to vector<1x128xf32>
    %cst_31 = arith.constant 11.3137083 : f32
    %74 = vector.broadcast %cst_31 : f32 to vector<1x128xf32>
    %75 = arith.mulf %73, %74 : vector<1x128xf32>
    %c4 = arith.constant 4 : index
    %c0_32 = arith.constant 0 : index
    %76 = vector.load %arg4[%c4, %c0_32] : memref<16x128xf32, #tpu.memory_space<vmem>>, vector<1x128xf32>
    tpu.vector_store %arg4[%c4, %c0_32], %75 {strides = array<i32>} : memref<16x128xf32, #tpu.memory_space<vmem>>, vector<1x128xf32>,
    %c5_i32 = arith.constant 5 : i32
    %77 = arith.addi %31, %c5_i32 : i32
    %78 = arith.index_cast %77 : i32 to index
    %79 = memref.load %arg1[%78] : memref<16xi32, #tpu.memory_space<smem>>
    %80 = arith.index_cast %79 : i32 to index
    %c0_33 = arith.constant 0 : index
    %c0_34 = arith.constant 0 : index
    %81 = vector.load %arg2[%80, %c0_33, %c0_34] : memref<256x1x128xf32, #tpu.memory_space<vmem>>, vector<1x1x128xf32>
    %82 = vector.shape_cast %81 : vector<1x1x128xf32> to vector<1x128xf32>
    %cst_35 = arith.constant 11.3137083 : f32
    %83 = vector.broadcast %cst_35 : f32 to vector<1x128xf32>
    %84 = arith.mulf %82, %83 : vector<1x128xf32>
    %c5 = arith.constant 5 : index
    %c0_36 = arith.constant 0 : index
    %85 = vector.load %arg4[%c5, %c0_36] : memref<16x128xf32, #tpu.memory_space<vmem>>, vector<1x128xf32>
    tpu.vector_store %arg4[%c5, %c0_36], %84 {strides = array<i32>} : memref<16x128xf32, #tpu.memory_space<vmem>>, vector<1x128xf32>,
    %c6_i32 = arith.constant 6 : i32
    %86 = arith.addi %31, %c6_i32 : i32
    %87 = arith.index_cast %86 : i32 to index
    %88 = memref.load %arg1[%87] : memref<16xi32, #tpu.memory_space<smem>>
    %89 = arith.index_cast %88 : i32 to index
    %c0_37 = arith.constant 0 : index
    %c0_38 = arith.constant 0 : index
    %90 = vector.load %arg2[%89, %c0_37, %c0_38] : memref<256x1x128xf32, #tpu.memory_space<vmem>>, vector<1x1x128xf32>
    %91 = vector.shape_cast %90 : vector<1x1x128xf32> to vector<1x128xf32>
    %cst_39 = arith.constant 11.3137083 : f32
    %92 = vector.broadcast %cst_39 : f32 to vector<1x128xf32>
    %93 = arith.mulf %91, %92 : vector<1x128xf32>
    %c6 = arith.constant 6 : index
    %c0_40 = arith.constant 0 : index
    %94 = vector.load %arg4[%c6, %c0_40] : memref<16x128xf32, #tpu.memory_space<vmem>>, vector<1x128xf32>
    tpu.vector_store %arg4[%c6, %c0_40], %93 {strides = array<i32>} : memref<16x128xf32, #tpu.memory_space<vmem>>, vector<1x128xf32>,
    %c7_i32 = arith.constant 7 : i32
    %95 = arith.addi %31, %c7_i32 : i32
    %96 = arith.index_cast %95 : i32 to index
    %97 = memref.load %arg1[%96] : memref<16xi32, #tpu.memory_space<smem>>
    %98 = arith.index_cast %97 : i32 to index
    %c0_41 = arith.constant 0 : index
    %c0_42 = arith.constant 0 : index
    %99 = vector.load %arg2[%98, %c0_41, %c0_42] : memref<256x1x128xf32, #tpu.memory_space<vmem>>, vector<1x1x128xf32>
    %100 = vector.shape_cast %99 : vector<1x1x128xf32> to vector<1x128xf32>
    %cst_43 = arith.constant 11.3137083 : f32
    %101 = vector.broadcast %cst_43 : f32 to vector<1x128xf32>
    %102 = arith.mulf %100, %101 : vector<1x128xf32>
    %c7 = arith.constant 7 : index
    %c0_44 = arith.constant 0 : index
    %103 = vector.load %arg4[%c7, %c0_44] : memref<16x128xf32, #tpu.memory_space<vmem>>, vector<1x128xf32>
    tpu.vector_store %arg4[%c7, %c0_44], %102 {strides = array<i32>} : memref<16x128xf32, #tpu.memory_space<vmem>>, vector<1x128xf32>,
    %c8_i32_45 = arith.constant 8 : i32
    %104 = arith.addi %31, %c8_i32_45 : i32
    %105 = arith.index_cast %104 : i32 to index
    %106 = memref.load %arg1[%105] : memref<16xi32, #tpu.memory_space<smem>>
    %107 = arith.index_cast %106 : i32 to index
    %c0_46 = arith.constant 0 : index
    %c0_47 = arith.constant 0 : index
    %108 = vector.load %arg2[%107, %c0_46, %c0_47] : memref<256x1x128xf32, #tpu.memory_space<vmem>>, vector<1x1x128xf32>
    %109 = vector.shape_cast %108 : vector<1x1x128xf32> to vector<1x128xf32>
    %cst_48 = arith.constant 11.3137083 : f32
    %110 = vector.broadcast %cst_48 : f32 to vector<1x128xf32>
    %111 = arith.mulf %109, %110 : vector<1x128xf32>
    %c8 = arith.constant 8 : index
    %c0_49 = arith.constant 0 : index
    %112 = vector.load %arg4[%c8, %c0_49] : memref<16x128xf32, #tpu.memory_space<vmem>>, vector<1x128xf32>
    tpu.vector_store %arg4[%c8, %c0_49], %111 {strides = array<i32>} : memref<16x128xf32, #tpu.memory_space<vmem>>, vector<1x128xf32>,
    %c9_i32 = arith.constant 9 : i32
    %113 = arith.addi %31, %c9_i32 : i32
    %114 = arith.index_cast %113 : i32 to index
    %115 = memref.load %arg1[%114] : memref<16xi32, #tpu.memory_space<smem>>
    %116 = arith.index_cast %115 : i32 to index
    %c0_50 = arith.constant 0 : index
    %c0_51 = arith.constant 0 : index
    %117 = vector.load %arg2[%116, %c0_50, %c0_51] : memref<256x1x128xf32, #tpu.memory_space<vmem>>, vector<1x1x128xf32>
    %118 = vector.shape_cast %117 : vector<1x1x128xf32> to vector<1x128xf32>
    %cst_52 = arith.constant 11.3137083 : f32
    %119 = vector.broadcast %cst_52 : f32 to vector<1x128xf32>
    %120 = arith.mulf %118, %119 : vector<1x128xf32>
    %c9 = arith.constant 9 : index
    %c0_53 = arith.constant 0 : index
    %121 = vector.load %arg4[%c9, %c0_53] : memref<16x128xf32, #tpu.memory_space<vmem>>, vector<1x128xf32>
    tpu.vector_store %arg4[%c9, %c0_53], %120 {strides = array<i32>} : memref<16x128xf32, #tpu.memory_space<vmem>>, vector<1x128xf32>,
    %c10_i32 = arith.constant 10 : i32
    %122 = arith.addi %31, %c10_i32 : i32
    %123 = arith.index_cast %122 : i32 to index
    %124 = memref.load %arg1[%123] : memref<16xi32, #tpu.memory_space<smem>>
    %125 = arith.index_cast %124 : i32 to index
    %c0_54 = arith.constant 0 : index
    %c0_55 = arith.constant 0 : index
    %126 = vector.load %arg2[%125, %c0_54, %c0_55] : memref<256x1x128xf32, #tpu.memory_space<vmem>>, vector<1x1x128xf32>
    %127 = vector.shape_cast %126 : vector<1x1x128xf32> to vector<1x128xf32>
    %cst_56 = arith.constant 11.3137083 : f32
    %128 = vector.broadcast %cst_56 : f32 to vector<1x128xf32>
    %129 = arith.mulf %127, %128 : vector<1x128xf32>
    %c10 = arith.constant 10 : index
    %c0_57 = arith.constant 0 : index
    %130 = vector.load %arg4[%c10, %c0_57] : memref<16x128xf32, #tpu.memory_space<vmem>>, vector<1x128xf32>
    tpu.vector_store %arg4[%c10, %c0_57], %129 {strides = array<i32>} : memref<16x128xf32, #tpu.memory_space<vmem>>, vector<1x128xf32>,
    %c11_i32 = arith.constant 11 : i32
    %131 = arith.addi %31, %c11_i32 : i32
    %132 = arith.index_cast %131 : i32 to index
    %133 = memref.load %arg1[%132] : memref<16xi32, #tpu.memory_space<smem>>
    %134 = arith.index_cast %133 : i32 to index
    %c0_58 = arith.constant 0 : index
    %c0_59 = arith.constant 0 : index
    %135 = vector.load %arg2[%134, %c0_58, %c0_59] : memref<256x1x128xf32, #tpu.memory_space<vmem>>, vector<1x1x128xf32>
    %136 = vector.shape_cast %135 : vector<1x1x128xf32> to vector<1x128xf32>
    %cst_60 = arith.constant 11.3137083 : f32
    %137 = vector.broadcast %cst_60 : f32 to vector<1x128xf32>
    %138 = arith.mulf %136, %137 : vector<1x128xf32>
    %c11 = arith.constant 11 : index
    %c0_61 = arith.constant 0 : index
    %139 = vector.load %arg4[%c11, %c0_61] : memref<16x128xf32, #tpu.memory_space<vmem>>, vector<1x128xf32>
    tpu.vector_store %arg4[%c11, %c0_61], %138 {strides = array<i32>} : memref<16x128xf32, #tpu.memory_space<vmem>>, vector<1x128xf32>,
    %c12_i32 = arith.constant 12 : i32
    %140 = arith.addi %31, %c12_i32 : i32
    %141 = arith.index_cast %140 : i32 to index
    %142 = memref.load %arg1[%141] : memref<16xi32, #tpu.memory_space<smem>>
    %143 = arith.index_cast %142 : i32 to index
    %c0_62 = arith.constant 0 : index
    %c0_63 = arith.constant 0 : index
    %144 = vector.load %arg2[%143, %c0_62, %c0_63] : memref<256x1x128xf32, #tpu.memory_space<vmem>>, vector<1x1x128xf32>
    %145 = vector.shape_cast %144 : vector<1x1x128xf32> to vector<1x128xf32>
    %cst_64 = arith.constant 11.3137083 : f32
    %146 = vector.broadcast %cst_64 : f32 to vector<1x128xf32>
    %147 = arith.mulf %145, %146 : vector<1x128xf32>
    %c12 = arith.constant 12 : index
    %c0_65 = arith.constant 0 : index
    %148 = vector.load %arg4[%c12, %c0_65] : memref<16x128xf32, #tpu.memory_space<vmem>>, vector<1x128xf32>
    tpu.vector_store %arg4[%c12, %c0_65], %147 {strides = array<i32>} : memref<16x128xf32, #tpu.memory_space<vmem>>, vector<1x128xf32>,
    %c13_i32 = arith.constant 13 : i32
    %149 = arith.addi %31, %c13_i32 : i32
    %150 = arith.index_cast %149 : i32 to index
    %151 = memref.load %arg1[%150] : memref<16xi32, #tpu.memory_space<smem>>
    %152 = arith.index_cast %151 : i32 to index
    %c0_66 = arith.constant 0 : index
    %c0_67 = arith.constant 0 : index
    %153 = vector.load %arg2[%152, %c0_66, %c0_67] : memref<256x1x128xf32, #tpu.memory_space<vmem>>, vector<1x1x128xf32>
    %154 = vector.shape_cast %153 : vector<1x1x128xf32> to vector<1x128xf32>
    %cst_68 = arith.constant 11.3137083 : f32
    %155 = vector.broadcast %cst_68 : f32 to vector<1x128xf32>
    %156 = arith.mulf %154, %155 : vector<1x128xf32>
    %c13 = arith.constant 13 : index
    %c0_69 = arith.constant 0 : index
    %157 = vector.load %arg4[%c13, %c0_69] : memref<16x128xf32, #tpu.memory_space<vmem>>, vector<1x128xf32>
    tpu.vector_store %arg4[%c13, %c0_69], %156 {strides = array<i32>} : memref<16x128xf32, #tpu.memory_space<vmem>>, vector<1x128xf32>,
    %c14_i32 = arith.constant 14 : i32
    %158 = arith.addi %31, %c14_i32 : i32
    %159 = arith.index_cast %158 : i32 to index
    %160 = memref.load %arg1[%159] : memref<16xi32, #tpu.memory_space<smem>>
    %161 = arith.index_cast %160 : i32 to index
    %c0_70 = arith.constant 0 : index
    %c0_71 = arith.constant 0 : index
    %162 = vector.load %arg2[%161, %c0_70, %c0_71] : memref<256x1x128xf32, #tpu.memory_space<vmem>>, vector<1x1x128xf32>
    %163 = vector.shape_cast %162 : vector<1x1x128xf32> to vector<1x128xf32>
    %cst_72 = arith.constant 11.3137083 : f32
    %164 = vector.broadcast %cst_72 : f32 to vector<1x128xf32>
    %165 = arith.mulf %163, %164 : vector<1x128xf32>
    %c14 = arith.constant 14 : index
    %c0_73 = arith.constant 0 : index
    %166 = vector.load %arg4[%c14, %c0_73] : memref<16x128xf32, #tpu.memory_space<vmem>>, vector<1x128xf32>
    tpu.vector_store %arg4[%c14, %c0_73], %165 {strides = array<i32>} : memref<16x128xf32, #tpu.memory_space<vmem>>, vector<1x128xf32>,
    %c15_i32 = arith.constant 15 : i32
    %167 = arith.addi %31, %c15_i32 : i32
    %168 = arith.index_cast %167 : i32 to index
    %169 = memref.load %arg1[%168] : memref<16xi32, #tpu.memory_space<smem>>
    %170 = arith.index_cast %169 : i32 to index
    %c0_74 = arith.constant 0 : index
    %c0_75 = arith.constant 0 : index
    %171 = vector.load %arg2[%170, %c0_74, %c0_75] : memref<256x1x128xf32, #tpu.memory_space<vmem>>, vector<1x1x128xf32>
    %172 = vector.shape_cast %171 : vector<1x1x128xf32> to vector<1x128xf32>
    %cst_76 = arith.constant 11.3137083 : f32
    %173 = vector.broadcast %cst_76 : f32 to vector<1x128xf32>
    %174 = arith.mulf %172, %173 : vector<1x128xf32>
    %c15 = arith.constant 15 : index
    %c0_77 = arith.constant 0 : index
    %175 = vector.load %arg4[%c15, %c0_77] : memref<16x128xf32, #tpu.memory_space<vmem>>, vector<1x128xf32>
    tpu.vector_store %arg4[%c15, %c0_77], %174 {strides = array<i32>} : memref<16x128xf32, #tpu.memory_space<vmem>>, vector<1x128xf32>,
    return
  }
  func.func @transform_0(%arg0: i32, %arg1: memref<16xi32, #tpu.memory_space<smem>>) -> (i32, i32, i32) {
    %c0_i32 = arith.constant 0 : i32
    %c0_i32_0 = arith.constant 0 : i32
    %c0_i32_1 = arith.constant 0 : i32
    %c0_i32_2 = arith.constant 0 : i32
    return %c0_i32, %c0_i32_0, %c0_i32_1 : i32, i32, i32
  }
  func.func @transform_1(%arg0: i32, %arg1: memref<16xi32, #tpu.memory_space<smem>>) -> (i32, i32) {
    %c0_i32 = arith.constant 0 : i32
    %c0_i32_0 = arith.constant 0 : i32
    %c0_i32_1 = arith.constant 0 : i32
    return %c0_i32, %c0_i32_0 : i32, i32
  }
  func.func @transform_2(%arg0: i32, %arg1: memref<16xi32, #tpu.memory_space<smem>>) -> (i32, i32) {
    %c0_i32 = arith.constant 0 : i32
    %c0_i32_0 = arith.constant 0 : i32
    return %arg0, %c0_i32 : i32, i32
  }
  func.func @transform_3(%arg0: i32, %arg1: memref<16xi32, #tpu.memory_space<smem>>) -> (i32, i32) {
    %c0_i32 = arith.constant 0 : i32
    %c0_i32_0 = arith.constant 0 : i32
    return %arg0, %c0_i32 : i32, i32
  }
  func.func @transform_4(%arg0: i32, %arg1: memref<16xi32, #tpu.memory_space<smem>>) -> (i32, i32) {
    %c0_i32 = arith.constant 0 : i32
    %c0_i32_0 = arith.constant 0 : i32
    return %arg0, %c0_i32 : i32, i32
  }
}

</mosaic_0001>

<llo_original>
// kernel: custom-call
$region0: #{custom-call}
  %s0 = inlined_call_operand.vmem [shape: f32[8,8], index: 0, kind: input, shape index: {}]
  %s1 = inlined_call_operand.vmem [shape: f32[8,8], index: 1, kind: input, shape index: {}]
  %s2 = inlined_call_operand.hbm [shape: c64[8,8], index: 2, kind: output, shape index: {}]
  %s3 = scalar_lea.hbm %s2, 128
  $region1: #{custom-call} parent=0
    #allocation0 [shape = 's32[1]{0}', space=sflag, size = 0x4, scoped, tag = 'scoped memory for custom-call']
    %4 = vsyncpa [#allocation0], 0
    %s5 = sshll.u32 %s0, 4
    %s6 = int_to_ptr.vmem [resolvable:$true] %s5
    %8 = dma.vmem_to_hbm [thread:$0]  %s6, 128, %s2, [#allocation0]
    %9 = dma.done [#allocation0], 128
    %10 = vsyncpa [#allocation0], 1
  $region2: #{custom-call} parent=0
    #allocation1 [shape = 's32[1]{0}', space=sflag, size = 0x4, scoped, tag = 'scoped memory for custom-call']
    %11 = vsyncpa [#allocation1], 0
    %s12 = sshll.u32 %s1, 4
    %s13 = int_to_ptr.vmem [resolvable:$true] %s12
    %15 = dma.vmem_to_hbm [thread:$0]  %s13, 128, %s3, [#allocation1]
    %16 = dma.done [#allocation1], 128
    %17 = vsyncpa [#allocation1], 1

// kernel: embedding_pipeline_forward.1
$region0: #{embedding_pipeline_forward.1}
  #allocation0 [shape = 'u32[]', space=smem, size = 0x4, offset = 0x4, fixed_abs, tag = 'smem constant byte address 0x4 - core index']
  #allocation1 [shape = 'u32[144,128]{1,0:T(1,128)}', space=vmem, size = 0x12000, scoped, tag = 'internal scratch']
  #allocation2 [shape = 's32[1]{0}', space=sflag, size = 0x4, scoped, tag = 'scoped memory for embedding_pipeline_forward.1']
  #allocation3 [shape = 'u8[512]{0}', space=smem, size = 0x200, scoped, tag = 'prefetched SMEM operand 0']
  %s0 = inlined_call_operand.vmem [shape: s32[16], index: 0, kind: input, shape index: {}]
  %s1 = inlined_call_operand.hbm [shape: f32[256,1,128], index: 1, kind: input, shape index: {}]
  %s2 = inlined_call_operand.vmem [shape: f32[8,128], index: 2, kind: input, shape index: {}]
  %s3 = inlined_call_operand.hbm [shape: f32[16,128], index: 3, kind: output, shape index: {0}]
  %s4 = inlined_call_operand.hbm [shape: f32[8,8], index: 4, kind: output, shape index: {1}]
  %s5 = inlined_call_operand.vmem [shape: f32[8,128], index: 5, kind: output, shape index: {2}]
  %6 = xla_tuple %s3, %s4, %s5
  %s7 = sld [smem:[#allocation0]]
  $region38: #{embedding_pipeline_forward.1} parent=0
    _
  %s9 = ssub.s32 1, %s7
  %s10 = scalar_select 0, %s9, %s7
  %s11 = sshll.u32 %s0, 4
  %s12 = int_to_ptr.vmem [resolvable:$true] %s11
  %14 = dma.vmem_to_smem %s12, 16, [#allocation3], [#allocation2]
  %15 = dma.done [#allocation2], 16
  %16 = sfence
  $region1: #{embedding_pipeline_forward.1} parent=0
    #allocation4 [shape = 'u8[131072]{0}', space=vmem, size = 0x20000, scoped, tag = 'input window, operand 1, single buffered']
    #allocation5 [shape = 's32[1]{0}', space=sflag, size = 0x4, scoped, tag = 'scoped memory for embedding_pipeline_forward.1']
    #allocation6 [shape = 's32[1]{0}', space=sflag, size = 0x4, scoped, tag = 'scoped memory for embedding_pipeline_forward.1']
    #allocation7 [shape = 'u8[8192]{0}', space=vmem, size = 0x2000, scoped, tag = 'output window, operand 0, single buffered']
    #allocation8 [shape = 'u8[4096]{0}', space=vmem, size = 0x1000, scoped, tag = 'output window, operand 1, single buffered']
    #allocation9 [shape = 's32[1]{0}', space=sflag, size = 0x4, scoped, tag = 'scoped memory for embedding_pipeline_forward.1']
    %17 = vsyncpa [#allocation5], 0
    %18 = vsyncpa [#allocation6], 0
    %19 = vsyncpa [#allocation9], 0
    // Predicated region
    $region2: #{embedding_pipeline_forward.1} parent=1 // pred_check
      _
    $region3: #{embedding_pipeline_forward.1} parent=1 // pred_check_branch
      %21 = sbr.rel (0) target = $region5
    $region4: #{embedding_pipeline_forward.1} parent=1 // pred_region
      %s23 = ssub.s32 4096, 4096
      %24 = vsyncadd [#allocation5], %s23
      %s25 = sshll.u32 [#allocation4], 4
      %s26 = int_to_ptr.vmem [resolvable:$true] %s25
      %31 = dma.hbm_to_vmem [thread:$0]  %s1, 4096, %s26, [#allocation5], 16, 16, 1
    $region5: #{embedding_pipeline_forward.1} parent=1 // pred_fallthru
      _
    // Predicated region
    $region6: #{embedding_pipeline_forward.1} parent=1 // pred_check
      _
    $region7: #{embedding_pipeline_forward.1} parent=1 // pred_check_branch
      %33 = sbr.rel (0) target = $region9
    $region8: #{embedding_pipeline_forward.1} parent=1 // pred_region
      _
    $region9: #{embedding_pipeline_forward.1} parent=1 // pred_fallthru
      _
    // Predicated region
    $region10: #{embedding_pipeline_forward.1} parent=1 // pred_check
      _
    $region11: #{embedding_pipeline_forward.1} parent=1 // pred_check_branch
      %35 = sbr.rel (0) target = $region13
    $region12: #{embedding_pipeline_forward.1} parent=1 // pred_region
      %36 = dma.done [#allocation5], 4096
    $region13: #{embedding_pipeline_forward.1} parent=1 // pred_fallthru
      _
    %s37 = smul.u32 0, 8
    %v38 = vlaneseq
    %v39 = vshrl.u32 %v38, 7
    %v40 = vstv %s37
    %v41 = vadd.s32 %v40, %v39
    %v42 = vlaneseq
    %v43 = vand.u32 %v42, 127
    %vm44 = vcmp.gt.s32.totalorder %v43, %v41
    %v45 = vsel %vm44, -2.3819763e+38, 0.0
    %vm46 = vcmask 64512
    %47 = vst.msk [vmem:[#allocation8] sm:$0xff] %vm46, %v45
    %v48 = vld [vmem:[%s2] sm:$0x1]
    %v49 = vld [vmem:[%s2 + $0x1] sm:$0x1]
    %v50 = vld [vmem:[%s2 + $0x2] sm:$0x1]
    %v51 = vcvt.s32.f32 %v41
    %v52 = vlaneseq
    %v53 = vshrl.u32 %v52, 7
    %v54 = vsub.s32 0, %v53
    %v55 = vrot.slane %v48, %v54
    %v56 = vmul.f32 %v51, %v55
    %v57 = vand.u32 2147483647, %v56
    %vm58 = vcmp.le.f32.partialorder %v57, 0.7853982
    %vm59 = vcmp.lt.s32.totalorder %v56, 0
    %v60 = vand.u32 %v56, 2139095040
    %v61 = vshrl.u32 %v60, 23
    %v62 = vsub.s32 %v61, 127
    %v63 = vand.u32 2147483647, %v56
    %v64 = vand.u32 %v63, 8388607
    %v65 = vor.u32 %v64, 8388608
    %v66 = vsub.s32 0, %v65
    %v67 = vadd.s32 %v62, 1
    %vm68 = vcmp.gt.s32.totalorder %v67, 0
    %v69 = vsel %vm68, %v67, 0
    %v70 = vshrl.u32 %v69, 5
    %v71 = vand.u32 %v69, 31
    %v72 = vsub.s32 32, %v71
    %v73 = vshrl.u32 683565275, %v72
    %v74 = vshll.u32 683565275, %v71
    %v75 = vshrl.u32 2475754826, %v72
    %v76 = vor.u32 %v74, %v75
    %v77 = vshll.u32 2475754826, %v71
    %v78 = vshrl.u32 2131351028, %v72
    %v79 = vor.u32 %v77, %v78
    %v80 = vshll.u32 2131351028, %v71
    %v81 = vshrl.u32 2102212464, %v72
    %v82 = vor.u32 %v80, %v81
    %v83 = vshll.u32 2102212464, %v71
    %v84 = vshrl.u32 920167782, %v72
    %v85 = vor.u32 %v83, %v84
    %v86 = vshll.u32 920167782, %v71
    %v87 = vshrl.u32 1326507024, %v72
    %v88 = vor.u32 %v86, %v87
    %vm89 = vcmp.lt.s32.totalorder %v70, 1
    %vm90 = vcmp.lt.s32.totalorder %v70, 2
    %vm91 = vcmp.lt.s32.totalorder %v70, 3
    %vm92 = vcmp.lt.s32.totalorder %v70, 4
    %v93 = vsel %vm89, %v73, %v76
    %v94 = vsel %vm92, %v82, 2102212464
    %v95 = vsel %vm91, %v79, %v94
    %v96 = vsel %vm90, %v93, %v95
    %v97 = vsel %vm89, %v76, %v79
    %v98 = vsel %vm92, %v85, 920167782
    %v99 = vsel %vm91, %v82, %v98
    %v100 = vsel %vm90, %v97, %v99
    %v101 = vsel %vm89, %v79, %v82
    %v102 = vsel %vm92, %v88, 1326507024
    %v103 = vsel %vm91, %v85, %v102
    %v104 = vsel %vm90, %v101, %v103
    %v105 = vshll.u32 %v65, 8
    %v106 = vmul.u32.u64.compose %v105, %v104
    %v107 = vextract.low.u32 %v106
    %v108 = vextract.high.u32 %v106
    %v109 = vmul.u32.u64.compose %v105, %v100
    %v110 = vextract.low.u32 %v109
    %v111 = vextract.high.u32 %v109
    %v112 = vmul.u32 %v105, %v96
    %v113 = vadd.s32 %v108, %v110
    %vm114 = vc.u32 %v108, %v110
    %v115 = vadd.s32 %v111, 1
    %v116 = vsel %vm114, %v115, %v111
    %v117 = vadd.s32 %v112, %v116
    %v118 = vadd.s32 %v117, 536870912
    %v119 = vshrl.u32 %v118, 30
    %v120 = vshll.u32 %v119, 30
    %v121 = vsub.s32 %v117, %v120
    %vm122 = vcmp.lt.s32.totalorder %v121, 0
    %v123 = vsub.s32 0, %v121
    %v124 = vsel %vm122, %v123, %v121
    %v125 = vclz %v124
    %v126 = vsub.s32 %v125, 2
    %vm127 = vcmp.gt.s32.totalorder 0, %v126
    %v128 = vsel %vm127, 0, %v126
    %v129 = vsub.s32 32, %v128
    %v130 = vshll.u32 %v121, %v128
    %v131 = vshrl.u32 %v113, %v129
    %v132 = vor.u32 %v130, %v131
    %v133 = vsub.s32 4294967266, %v128
    %v134 = vadd.s32 %v133, 127
    %v135 = vshll.u32 %v134, 23
    %v136 = vor.u32 4788187, %v135
    %v137 = vand.u32 2147483647, %v136
    %v139 = vcvt.s32.f32 %v132
    %v140 = vmul.f32 %v139, %v137
    %v141 = vxor.u32 %v140, 2147483648
    %v142 = vsel %vm59, %v141, %v140
    %v143 = vsub.s32 4, %v119
    %v144 = vsel %vm59, %v143, %v119
    %v145 = vsel %vm58, %v56, %v142
    %v146 = vsel %vm58, 0, %v144
    %v147 = vcosq.f32.pop %v145
    %v148 = vsinq.f32.pop %v145
    %vm149 = vweird.f32 %v56
    %v150 = vadd.s32 %v146, 3
    %v151 = vand.u32 %v150, 3
    %vm152 = vcmp.lt.s32.totalorder %v151, 2
    %vm153 = vcmp.eq.s32.totalorder %v151, 0
    %v154 = vxor.u32 %v148, 2147483648
    %v155 = vsel %vm153, %v147, %v154
    %vm156 = vcmp.eq.s32.totalorder %v151, 2
    %v157 = vxor.u32 %v147, 2147483648
    %v158 = vsel %vm156, %v157, %v148
    %v159 = vsel %vm152, %v155, %v158
    %v160 = vsel %vm149, nan, %v159
    %v161 = vlaneseq
    %v162 = vshrl.u32 %v161, 7
    %v163 = vsub.s32 0, %v162
    %v164 = vrot.slane %v49, %v163
    %v165 = vmul.f32 %v164, %v160
    %v166 = vsub.f32 %v50, %v49
    %v167 = vand.u32 2147483647, %v56
    %vm168 = vcmp.le.f32.partialorder %v167, 0.7853982
    %vm169 = vcmp.lt.s32.totalorder %v56, 0
    %v170 = vand.u32 %v56, 2139095040
    %v171 = vshrl.u32 %v170, 23
    %v172 = vsub.s32 %v171, 127
    %v173 = vand.u32 2147483647, %v56
    %v174 = vand.u32 %v173, 8388607
    %v175 = vor.u32 %v174, 8388608
    %v176 = vsub.s32 0, %v175
    %v177 = vadd.s32 %v172, 1
    %vm178 = vcmp.gt.s32.totalorder %v177, 0
    %v179 = vsel %vm178, %v177, 0
    %v180 = vshrl.u32 %v179, 5
    %v181 = vand.u32 %v179, 31
    %v182 = vsub.s32 32, %v181
    %v183 = vshrl.u32 683565275, %v182
    %v184 = vshll.u32 683565275, %v181
    %v185 = vshrl.u32 2475754826, %v182
    %v186 = vor.u32 %v184, %v185
    %v187 = vshll.u32 2475754826, %v181
    %v188 = vshrl.u32 2131351028, %v182
    %v189 = vor.u32 %v187, %v188
    %v190 = vshll.u32 2131351028, %v181
    %v191 = vshrl.u32 2102212464, %v182
    %v192 = vor.u32 %v190, %v191
    %v193 = vshll.u32 2102212464, %v181
    %v194 = vshrl.u32 920167782, %v182
    %v195 = vor.u32 %v193, %v194
    %v196 = vshll.u32 920167782, %v181
    %v197 = vshrl.u32 1326507024, %v182
    %v198 = vor.u32 %v196, %v197
    %vm199 = vcmp.lt.s32.totalorder %v180, 1
    %vm200 = vcmp.lt.s32.totalorder %v180, 2
    %vm201 = vcmp.lt.s32.totalorder %v180, 3
    %vm202 = vcmp.lt.s32.totalorder %v180, 4
    %v203 = vsel %vm199, %v183, %v186
    %v204 = vsel %vm202, %v192, 2102212464
    %v205 = vsel %vm201, %v189, %v204
    %v206 = vsel %vm200, %v203, %v205
    %v207 = vsel %vm199, %v186, %v189
    %v208 = vsel %vm202, %v195, 920167782
    %v209 = vsel %vm201, %v192, %v208
    %v210 = vsel %vm200, %v207, %v209
    %v211 = vsel %vm199, %v189, %v192
    %v212 = vsel %vm202, %v198, 1326507024
    %v213 = vsel %vm201, %v195, %v212
    %v214 = vsel %vm200, %v211, %v213
    %v215 = vshll.u32 %v175, 8
    %v216 = vmul.u32.u64.compose %v215, %v214
    %v217 = vextract.low.u32 %v216
    %v218 = vextract.high.u32 %v216
    %v219 = vmul.u32.u64.compose %v215, %v210
    %v220 = vextract.low.u32 %v219
    %v221 = vextract.high.u32 %v219
    %v222 = vmul.u32 %v215, %v206
    %v223 = vadd.s32 %v218, %v220
    %vm224 = vc.u32 %v218, %v220
    %v225 = vadd.s32 %v221, 1
    %v226 = vsel %vm224, %v225, %v221
    %v227 = vadd.s32 %v222, %v226
    %v228 = vadd.s32 %v227, 536870912
    %v229 = vshrl.u32 %v228, 30
    %v230 = vshll.u32 %v229, 30
    %v231 = vsub.s32 %v227, %v230
    %vm232 = vcmp.lt.s32.totalorder %v231, 0
    %v233 = vsub.s32 0, %v231
    %v234 = vsel %vm232, %v233, %v231
    %v235 = vclz %v234
    %v236 = vsub.s32 %v235, 2
    %vm237 = vcmp.gt.s32.totalorder 0, %v236
    %v238 = vsel %vm237, 0, %v236
    %v239 = vsub.s32 32, %v238
    %v240 = vshll.u32 %v231, %v238
    %v241 = vshrl.u32 %v223, %v239
    %v242 = vor.u32 %v240, %v241
    %v243 = vsub.s32 4294967266, %v238
    %v244 = vadd.s32 %v243, 127
    %v245 = vshll.u32 %v244, 23
    %v246 = vor.u32 4788187, %v245
    %v247 = vand.u32 2147483647, %v246
    %v249 = vcvt.s32.f32 %v242
    %v250 = vmul.f32 %v249, %v247
    %v251 = vxor.u32 %v250, 2147483648
    %v252 = vsel %vm169, %v251, %v250
    %v253 = vsub.s32 4, %v229
    %v254 = vsel %vm169, %v253, %v229
    %v255 = vsel %vm168, %v56, %v252
    %v256 = vsel %vm168, 0, %v254
    %v257 = vcosq.f32.pop %v255
    %v258 = vsinq.f32.pop %v255
    %vm259 = vweird.f32 %v56
    %v260 = vand.u32 %v256, 3
    %vm261 = vcmp.lt.s32.totalorder %v260, 2
    %vm262 = vcmp.eq.s32.totalorder %v260, 0
    %v263 = vxor.u32 %v258, 2147483648
    %v264 = vsel %vm262, %v257, %v263
    %vm265 = vcmp.eq.s32.totalorder %v260, 2
    %v266 = vxor.u32 %v257, 2147483648
    %v267 = vsel %vm265, %v266, %v258
    %v268 = vsel %vm261, %v264, %v267
    %v269 = vsel %vm259, nan, %v268
    %v270 = vlaneseq
    %v271 = vshrl.u32 %v270, 7
    %v272 = vsub.s32 0, %v271
    %v273 = vrot.slane %v166, %v272
    %v274 = vmul.f32 %v273, %v269
    %v275 = vadd.f32 %v165, %v274
    %276 = vst [vmem:[%s5] sm:$0xff] %v275
    %s277 = smul.u32 0, 16
    %s278 = sld [smem:[#allocation3 + %s277]]
    %s279 = scalar_lea.vmem [#allocation4], %s278
    %v280 = vld [vmem:[%s279] sm:$0x1]
    %v281 = vmul.f32 %v280, 11.313708
    %282 = vst [vmem:[#allocation7] sm:$0x1] %v281
    %s283 = sadd.s32 %s277, 1
    %s284 = sld [smem:[#allocation3 + %s283]]
    %s285 = scalar_lea.vmem [#allocation4], %s284
    %v286 = vld [vmem:[%s285] sm:$0x1]
    %v287 = vmul.f32 %v286, 11.313708
    %288 = vst [vmem:[#allocation7 + $0x1] sm:$0x1] %v287
    %s289 = sadd.s32 %s277, 2
    %s290 = sld [smem:[#allocation3 + %s289]]
    %s291 = scalar_lea.vmem [#allocation4], %s290
    %v292 = vld [vmem:[%s291] sm:$0x1]
    %v293 = vmul.f32 %v292, 11.313708
    %294 = vst [vmem:[#allocation7 + $0x2] sm:$0x1] %v293
    %s295 = sadd.s32 %s277, 3
    %s296 = sld [smem:[#allocation3 + %s295]]
    %s297 = scalar_lea.vmem [#allocation4], %s296
    %v298 = vld [vmem:[%s297] sm:$0x1]
    %v299 = vmul.f32 %v298, 11.313708
    %300 = vst [vmem:[#allocation7 + $0x3] sm:$0x1] %v299
    %s301 = sadd.s32 %s277, 4
    %s302 = sld [smem:[#allocation3 + %s301]]
    %s303 = scalar_lea.vmem [#allocation4], %s302
    %v304 = vld [vmem:[%s303] sm:$0x1]
    %v305 = vmul.f32 %v304, 11.313708
    %306 = vst [vmem:[#allocation7 + $0x4] sm:$0x1] %v305
    %s307 = sadd.s32 %s277, 5
    %s308 = sld [smem:[#allocation3 + %s307]]
    %s309 = scalar_lea.vmem [#allocation4], %s308
    %v310 = vld [vmem:[%s309] sm:$0x1]
    %v311 = vmul.f32 %v310, 11.313708
    %312 = vst [vmem:[#allocation7 + $0x5] sm:$0x1] %v311
    %s313 = sadd.s32 %s277, 6
    %s314 = sld [smem:[#allocation3 + %s313]]
    %s315 = scalar_lea.vmem [#allocation4], %s314
    %v316 = vld [vmem:[%s315] sm:$0x1]
    %v317 = vmul.f32 %v316, 11.313708
    %318 = vst [vmem:[#allocation7 + $0x6] sm:$0x1] %v317
    %s319 = sadd.s32 %s277, 7
    %s320 = sld [smem:[#allocation3 + %s319]]
    %s321 = scalar_lea.vmem [#allocation4], %s320
    %v322 = vld [vmem:[%s321] sm:$0x1]
    %v323 = vmul.f32 %v322, 11.313708
    %324 = vst [vmem:[#allocation7 + $0x7] sm:$0x1] %v323
    %s325 = sadd.s32 %s277, 8
    %s326 = sld [smem:[#allocation3 + %s325]]
    %s327 = scalar_lea.vmem [#allocation4], %s326
    %v328 = vld [vmem:[%s327] sm:$0x1]
    %v329 = vmul.f32 %v328, 11.313708
    %330 = vst [vmem:[#allocation7 + $0x8] sm:$0x1] %v329
    %s331 = sadd.s32 %s277, 9
    %s332 = sld [smem:[#allocation3 + %s331]]
    %s333 = scalar_lea.vmem [#allocation4], %s332
    %v334 = vld [vmem:[%s333] sm:$0x1]
    %v335 = vmul.f32 %v334, 11.313708
    %336 = vst [vmem:[#allocation7 + $0x9] sm:$0x1] %v335
    %s337 = sadd.s32 %s277, 10
    %s338 = sld [smem:[#allocation3 + %s337]]
    %s339 = scalar_lea.vmem [#allocation4], %s338
    %v340 = vld [vmem:[%s339] sm:$0x1]
    %v341 = vmul.f32 %v340, 11.313708
    %342 = vst [vmem:[#allocation7 + $0xa] sm:$0x1] %v341
    %s343 = sadd.s32 %s277, 11
    %s344 = sld [smem:[#allocation3 + %s343]]
    %s345 = scalar_lea.vmem [#allocation4], %s344
    %v346 = vld [vmem:[%s345] sm:$0x1]
    %v347 = vmul.f32 %v346, 11.313708
    %348 = vst [vmem:[#allocation7 + $0xb] sm:$0x1] %v347
    %s349 = sadd.s32 %s277, 12
    %s350 = sld [smem:[#allocation3 + %s349]]
    %s351 = scalar_lea.vmem [#allocation4], %s350
    %v352 = vld [vmem:[%s351] sm:$0x1]
    %v353 = vmul.f32 %v352, 11.313708
    %354 = vst [vmem:[#allocation7 + $0xc] sm:$0x1] %v353
    %s355 = sadd.s32 %s277, 13
    %s356 = sld [smem:[#allocation3 + %s355]]
    %s357 = scalar_lea.vmem [#allocation4], %s356
    %v358 = vld [vmem:[%s357] sm:$0x1]
    %v359 = vmul.f32 %v358, 11.313708
    %360 = vst [vmem:[#allocation7 + $0xd] sm:$0x1] %v359
    %s361 = sadd.s32 %s277, 14
    %s362 = sld [smem:[#allocation3 + %s361]]
    %s363 = scalar_lea.vmem [#allocation4], %s362
    %v364 = vld [vmem:[%s363] sm:$0x1]
    %v365 = vmul.f32 %v364, 11.313708
    %366 = vst [vmem:[#allocation7 + $0xe] sm:$0x1] %v365
    %s367 = sadd.s32 %s277, 15
    %s368 = sld [smem:[#allocation3 + %s367]]
    %s369 = scalar_lea.vmem [#allocation4], %s368
    %v370 = vld [vmem:[%s369] sm:$0x1]
    %v371 = vmul.f32 %v370, 11.313708
    %372 = vst [vmem:[#allocation7 + $0xf] sm:$0x1] %v371
    // Predicated region
    $region14: #{embedding_pipeline_forward.1} parent=1 // pred_check
      _
    $region15: #{embedding_pipeline_forward.1} parent=1 // pred_check_branch
      %374 = sbr.rel (0) target = $region17
    $region16: #{embedding_pipeline_forward.1} parent=1 // pred_region
      %s376 = ssub.s32 256, 256
      %377 = vsyncadd [#allocation6], %s376
      %s378 = sshll.u32 [#allocation7], 4
      %s379 = int_to_ptr.vmem [resolvable:$true] %s378
      %384 = dma.vmem_to_hbm [thread:$0]  %s379, 256, %s3, [#allocation6], 128, 128, 8
    $region17: #{embedding_pipeline_forward.1} parent=1 // pred_fallthru
      _
    // Predicated region
    $region18: #{embedding_pipeline_forward.1} parent=1 // pred_check
      _
    $region19: #{embedding_pipeline_forward.1} parent=1 // pred_check_branch
      %386 = sbr.rel (0) target = $region21
    $region20: #{embedding_pipeline_forward.1} parent=1 // pred_region
      %s388 = ssub.s32 128, 128
      %389 = vsyncadd [#allocation9], %s388
      %s391 = sshll.u32 [#allocation8], 4
      %s392 = int_to_ptr.vmem [resolvable:$true] %s391
      %394 = dma.vmem_to_hbm [thread:$0]  %s392, 128, %s4, [#allocation9]
    $region21: #{embedding_pipeline_forward.1} parent=1 // pred_fallthru
      _
    // Predicated region
    $region22: #{embedding_pipeline_forward.1} parent=1 // pred_check
      _
    $region23: #{embedding_pipeline_forward.1} parent=1 // pred_check_branch
      %396 = sbr.rel (0) target = $region25
    $region24: #{embedding_pipeline_forward.1} parent=1 // pred_region
      _
    $region25: #{embedding_pipeline_forward.1} parent=1 // pred_fallthru
      _
    // Predicated region
    $region26: #{embedding_pipeline_forward.1} parent=1 // pred_check
      _
    $region27: #{embedding_pipeline_forward.1} parent=1 // pred_check_branch
      %398 = sbr.rel (0) target = $region29
    $region28: #{embedding_pipeline_forward.1} parent=1 // pred_region
      %399 = dma.done [#allocation6], 256
    $region29: #{embedding_pipeline_forward.1} parent=1 // pred_fallthru
      _
    // Predicated region
    $region30: #{embedding_pipeline_forward.1} parent=1 // pred_check
      _
    $region31: #{embedding_pipeline_forward.1} parent=1 // pred_check_branch
      %401 = sbr.rel (0) target = $region33
    $region32: #{embedding_pipeline_forward.1} parent=1 // pred_region
      %402 = dma.done [#allocation9], 128
    $region33: #{embedding_pipeline_forward.1} parent=1 // pred_fallthru
      _
    // Predicated region
    $region34: #{embedding_pipeline_forward.1} parent=1 // pred_check
      _
    $region35: #{embedding_pipeline_forward.1} parent=1 // pred_check_branch
      %404 = sbr.rel (0) target = $region37
    $region36: #{embedding_pipeline_forward.1} parent=1 // pred_region
      _
    $region37: #{embedding_pipeline_forward.1} parent=1 // pred_fallthru
      _
    %405 = vsyncpa [#allocation5], 1
    %406 = vsyncpa [#allocation6], 1
    %407 = vsyncpa [#allocation9], 1

</llo_original>
